<compile_context>
chip_gen: v7x
topology: tpu7x:2x2x1
jax: 0.10.0
libtpu: 0.0.40
codegen_flags: <defaults>
</compile_context>

<pallas_src>
import jax
import jax.numpy as jnp
from jax.experimental import pallas as pl
from jax.experimental.pallas import tpu as pltpu

BN_EPS = 1e-5
_VMEM_LIMIT_BYTES = 48 * 1024 * 1024     # explicit scoped-VMEM limit, safe on v5e/v6e/v7x
_VMEM_BUDGET_BYTES = 40 * 1024 * 1024    # working-set budget used for tile sizing


def _round_up(v, m):
    return ((v + m - 1) // m) * m


def _choose_batch_tile(n, x_row_elems, fc1_in, hid, out_ch,
                       budget_bytes=_VMEM_BUDGET_BYTES):
    """Largest batch tile (multiple of 8) whose double-buffered working set fits VMEM."""
    cap = _round_up(max(n, 1), 8)
    chosen = 8
    for tn in (512, 256, 128, 64, 32, 16, 8):
        k1 = (2 * tn * x_row_elems * 2        # x tile (bf16), double-buffered
              + 2 * tn * hid * 4              # h output tile (f32), double-buffered
              + 2 * fc1_in * hid * 2          # resident w1 (bf16), 2 buffers worst case
              + 2 * 2 * hid * 4)              # per-tile stats output
        k2 = (2 * tn * hid * 4                # h input tile
              + 2 * hid * out_ch * 2          # resident w2 (bf16)
              + 2 * tn * out_ch * 4           # output tile
              + 2 * (2 * hid + out_ch) * 4)   # scale / shift / b2
        if max(k1, k2) <= budget_bytes:
            chosen = tn
            break
    return min(chosen, cap)


def _make_fc1_kernel(tn, n_valid, pool):
    """Pass 1: (optional avg-pool) + fc1 + per-tile BN partial statistics."""

    def kernel(x_ref, w1_ref, h_ref, stats_ref):
        tile = pl.program_id(0)
        if pool:
            # x_ref: (tn, H*W, C) bf16 -> mean over the spatial (sublane) axis, in f32.
            feat = jnp.mean(x_ref[...].astype(jnp.float32), axis=1)      # (tn, C)
        else:
            feat = x_ref[...].astype(jnp.float32)                        # (tn, C*H*W)

        # fc1 on the MXU: bf16 operands, f32 accumulation.
        # NOTE: the Linear-1 bias is intentionally omitted -- with batch-statistics
        # BatchNorm it is exactly cancelled by the mean subtraction.
        h = jnp.dot(feat.astype(jnp.bfloat16), w1_ref[...],
                    preferred_element_type=jnp.float32)                  # (tn, hid) f32
        h_ref[...] = h

        # Per-tile partial BN stats (sum, sum-of-squares), masking padded batch rows.
        row = tile * tn + jax.lax.broadcasted_iota(jnp.int32, (tn, 1), 0)
        valid = (row < n_valid).astype(jnp.float32)                      # (tn, 1)
        hm = h * valid
        ssum = jnp.sum(hm, axis=0, keepdims=True)                        # (1, hid)
        ssq = jnp.sum(hm * h, axis=0, keepdims=True)                     # (1, hid)
        stats_ref[...] = jnp.concatenate([ssum, ssq], axis=0)[None]      # (1, 2, hid)

    return kernel


def _bn_relu_fc2_kernel(h_ref, scale_ref, shift_ref, w2_ref, b2_ref, o_ref):
    """Pass 2: fused BN (scale/shift) + ReLU + fc2."""
    y = h_ref[...] * scale_ref[...] + shift_ref[...]                     # f32 BN apply
    y = jnp.maximum(y, 0.0)                                              # ReLU
    o_ref[...] = (jnp.dot(y.astype(jnp.bfloat16), w2_ref[...],
                          preferred_element_type=jnp.float32)
                  + b2_ref[...]).astype(o_ref.dtype)


def nonlinear_neck_v2(x, params, with_avg_pool=True, batch_tile=None):
    """x: (N, C, H, W) float32. Returns [out] with out: (N, out_channels) float32."""
    w1, b1, gamma, beta, w2, b2 = params
    del b1  # cancelled by batch-stat BN (see kernel comment); zero by init anyway
    n = x.shape[0]

    if with_avg_pool:
        _, c, hh, ww = x.shape
        hw = hh * ww
        # channel-last: (N, H*W, C) so C is on the 128-lane axis
        x_lay = jnp.transpose(x, (0, 2, 3, 1)).reshape(n, hw, c)
        fc1_in = c
        x_row_elems = hw * c
    else:
        # lane-dense (N, C*H*W) feature matrix; matches torch's x.view(N, -1) ordering
        x_lay = x.reshape(n, -1)
        fc1_in = x_lay.shape[1]
        x_row_elems = fc1_in
        hw = None

    assert w1.shape[0] == fc1_in, "fc1 in_features mismatch"
    hid = w1.shape[1]
    out_ch = w2.shape[1]   # best if a multiple of 128 (BYOL's 256 is); else masked stores

    if batch_tile is None:
        tn = _choose_batch_tile(n, x_row_elems, fc1_in, hid, out_ch)
    else:
        tn = batch_tile
    tn = max(8, (tn // 8) * 8)                 # MXU/sublane friendly
    n_pad = _round_up(n, tn)
    n_tiles = n_pad // tn
    pad = n_pad - n

    if with_avg_pool:
        x_p = jnp.pad(x_lay, ((0, pad), (0, 0), (0, 0)))
        x_spec = pl.BlockSpec((tn, hw, fc1_in), lambda i: (i, 0, 0))
    else:
        x_p = jnp.pad(x_lay, ((0, pad), (0, 0)))
        x_spec = pl.BlockSpec((tn, fc1_in), lambda i: (i, 0))
    x_p = x_p.astype(jnp.bfloat16)             # halve dominant HBM traffic
    w1_b = w1.astype(jnp.bfloat16)
    w2_b = w2.astype(jnp.bfloat16)

    cparams = pltpu.CompilerParams(
        dimension_semantics=("parallel",),     # batch tiles are independent (megacore on v7x)
        vmem_limit_bytes=_VMEM_LIMIT_BYTES,
    )

    # ---- pass 1: pool + fc1 + per-tile BN partial stats --------------------------------
    h_all, partial = pl.pallas_call(
        _make_fc1_kernel(tn, n, with_avg_pool),
        grid=(n_tiles,),
        out_shape=(jax.ShapeDtypeStruct((n_pad, hid), jnp.float32),
                   jax.ShapeDtypeStruct((n_tiles, 2, hid), jnp.float32)),
        in_specs=[x_spec,
                  pl.BlockSpec((fc1_in, hid), lambda i: (0, 0))],   # resident w1
        out_specs=(pl.BlockSpec((tn, hid), lambda i: (i, 0)),
                   pl.BlockSpec((1, 2, hid), lambda i: (i, 0, 0))),
        compiler_params=cparams,
    )(x_p, w1_b)

    # ---- finalize batch statistics (tiny O(hid) work; exact global batch stats) --------
    stats = jnp.sum(partial, axis=0)                               # (2, hid)
    mean = stats[0] / n
    var = jnp.maximum(stats[1] / n - mean * mean, 0.0)             # biased var (training BN)
    scale_v = gamma.reshape(-1) * jax.lax.rsqrt(var + BN_EPS)      # fused gamma * rsqrt
    shift_v = beta.reshape(-1) - mean * scale_v
    scale = scale_v.reshape(1, hid).astype(jnp.float32)
    shift = shift_v.reshape(1, hid).astype(jnp.float32)

    # ---- pass 2: BN apply + ReLU + fc2 --------------------------------------------------
    out = pl.pallas_call(
        _bn_relu_fc2_kernel,
        grid=(n_tiles,),
        out_shape=jax.ShapeDtypeStruct((n_pad, out_ch), jnp.float32),
        in_specs=[pl.BlockSpec((tn, hid), lambda i: (i, 0)),
                  pl.BlockSpec((1, hid), lambda i: (0, 0)),
                  pl.BlockSpec((1, hid), lambda i: (0, 0)),
                  pl.BlockSpec((hid, out_ch), lambda i: (0, 0)),    # resident w2
                  pl.BlockSpec((1, out_ch), lambda i: (0, 0))],
        out_specs=pl.BlockSpec((tn, out_ch), lambda i: (i, 0)),
        compiler_params=cparams,
    )(h_all, scale, shift, w2_b, b2.reshape(1, out_ch))

    return [out[:n]]


def init_params(key, in_channels, hid_channels, out_channels, std=0.01):
    """Matches _init_weights(init_linear='normal'): Linear W ~ N(0, std^2), Linear b = 0,
    BN weight = 1, BN bias = 0. Linear weights stored transposed: (in, out)."""
    k1, k2 = jax.random.split(key)
    w1 = std * jax.random.normal(k1, (in_channels, hid_channels), jnp.float32)
    b1 = jnp.zeros((1, hid_channels), jnp.float32)
    gamma = jnp.ones((1, hid_channels), jnp.float32)
    beta = jnp.zeros((1, hid_channels), jnp.float32)
    w2 = std * jax.random.normal(k2, (hid_channels, out_channels), jnp.float32)
    b2 = jnp.zeros((1, out_channels), jnp.float32)
    return (w1, b1, gamma, beta, w2, b2)


def _reference_f32(x, params, with_avg_pool=True):
    """Pure-f32 JAX reference (module semantics, training-mode BN)."""
    w1, b1, gamma, beta, w2, b2 = params
    n = x.shape[0]
    feat = jnp.mean(x, axis=(2, 3)) if with_avg_pool else x.reshape(n, -1)
    h = feat @ w1 + b1
    mu = jnp.mean(h, axis=0, keepdims=True)
    var = jnp.mean((h - mu) ** 2, axis=0, keepdims=True)
    h = (h - mu) * jax.lax.rsqrt(var + BN_EPS) * gamma + beta
    h = jnp.maximum(h, 0.0)
    return h @ w2 + b2


def _reference_kernel_math(x, params, with_avg_pool=True):
    """Mirrors the kernel's bf16 MXU feeds and sum/sum-of-squares BN stats exactly."""
    w1, _, gamma, beta, w2, b2 = params
    n = x.shape[0]
    xb = x.astype(jnp.bfloat16).astype(jnp.float32)
    feat = jnp.mean(xb, axis=(2, 3)) if with_avg_pool else xb.reshape(n, -1)
    h = jnp.dot(feat.astype(jnp.bfloat16), w1.astype(jnp.bfloat16),
                preferred_element_type=jnp.float32)
    mu = jnp.sum(h, axis=0) / n
    var = jnp.maximum(jnp.sum(h * h, axis=0) / n - mu * mu, 0.0)
    scale = gamma.reshape(-1) * jax.lax.rsqrt(var + BN_EPS)
    shift = beta.reshape(-1) - mu * scale
    y = jnp.maximum(h * scale[None] + shift[None], 0.0)
    return jnp.dot(y.astype(jnp.bfloat16), w2.astype(jnp.bfloat16),
                   preferred_element_type=jnp.float32) + b2


if __name__ == "__main__":
    key = jax.random.PRNGKey(0)
    k_x, k_x2, k_p = jax.random.split(key, 3)

    # Small but TPU-layout-friendly shapes (C, HID, OUT lane-dense).
    N, C, H, W = 20, 128, 4, 4
    HID, OUT = 256, 128

    x = jax.random.normal(k_x, (N, C, H, W), jnp.float32)
    params = init_params(k_p, in_channels=C, hid_channels=HID, out_channels=OUT)

    neck = jax.jit(nonlinear_neck_v2, static_argnames=("with_avg_pool", "batch_tile"))

    # Module forward takes a tuple/list of length 1.
    inputs = [x]
    assert len(inputs) == 1

    # Force a small batch tile so the multi-tile grid, two-pass BN stats and the
    # padded/masked last tile (N=20 -> padded to 24) all get exercised.
    out = neck(inputs[0], params, with_avg_pool=True, batch_tile=8)[0]
    out = jax.block_until_ready(out)
    assert out.shape == (N, OUT)

    ref_mirror = _reference_kernel_math(x, params, with_avg_pool=True)
    ref_f32 = _reference_f32(x, params, with_avg_pool=True)
    assert jnp.allclose(out, ref_mirror, atol=1e-3, rtol=1e-3), "mismatch vs bf16-mirrored ref"
    assert jnp.allclose(out, ref_f32, atol=2e-2, rtol=2e-2), "mismatch vs f32 reference"

    # with_avg_pool=False path: feature dim = C2*H*W = 128 == fc1 in_features -> reuse params.
    C2 = C // (H * W)
    x2 = jax.random.normal(k_x2, (N, C2, H, W), jnp.float32)
    out2 = neck(x2, params, with_avg_pool=False)[0]          # auto-chosen batch tile
    out2 = jax.block_until_ready(out2)
    assert out2.shape == (N, OUT)
    ref2 = _reference_kernel_math(x2, params, with_avg_pool=False)
    assert jnp.allclose(out2, ref2, atol=1e-3, rtol=1e-3), "mismatch (no-pool path)"

    print("KERNEL_OK")
</pallas_src>

<mosaic_0001>
module attributes {stable_mosaic.version = 11 : i64} {
  func.func @kernel(%arg0: i32, %arg1: memref<8x16x128xbf16, #tpu.memory_space<vmem>>, %arg2: memref<128x256xbf16, #tpu.memory_space<vmem>>, %arg3: memref<8x256xf32, #tpu.memory_space<vmem>>, %arg4: memref<1x2x256xf32, #tpu.memory_space<vmem>>) attributes {dimension_semantics = [#tpu.dimension_semantics<parallel>], iteration_bounds = array<i64: 3>, scalar_prefetch = 0 : i64, scratch_operands = 0 : i64, tpu.core_type = #tpu.core_type<tc>, window_params = [{transform_indices = @transform_0, window_bounds = array<i64: 8, 16, 128>}, {pipeline_mode = #tpu.pipeline_mode<synchronous>, transform_indices = @transform_1, window_bounds = array<i64: 128, 256>}, {transform_indices = @transform_2, window_bounds = array<i64: 8, 256>}, {transform_indices = @transform_3, window_bounds = array<i64: 1, 2, 256>}]} {
    %c0 = arith.constant 0 : index
    %c0_0 = arith.constant 0 : index
    %c0_1 = arith.constant 0 : index
    %0 = vector.load %arg1[%c0, %c0_0, %c0_1] : memref<8x16x128xbf16, #tpu.memory_space<vmem>>, vector<8x16x128xbf16>
    %1 = arith.extf %0 : vector<8x16x128xbf16> to vector<8x16x128xf32>
    %cst = arith.constant dense<0.000000e+00> : vector<8x128xf32>
    %2 = vector.multi_reduction <add>, %1, %cst [1] : vector<8x16x128xf32> to vector<8x128xf32>
    %cst_2 = arith.constant 1.600000e+01 : f32
    %3 = vector.broadcast %cst_2 : f32 to vector<8x128xf32>
    %4 = arith.divf %2, %3 : vector<8x128xf32>
    %5 = arith.truncf %4 : vector<8x128xf32> to vector<8x128xbf16>
    %c0_3 = arith.constant 0 : index
    %c0_4 = arith.constant 0 : index
    %6 = vector.load %arg2[%c0_3, %c0_4] : memref<128x256xbf16, #tpu.memory_space<vmem>>, vector<128x256xbf16>
    %cst_5 = arith.constant dense<0.000000e+00> : vector<8x256xf32>
    %7 = tpu.matmul %5, %6, %cst_5 {dimension_numbers = #tpu.dot_dimension_numbers<[1], [0], [0], [1], [0, 0, 1, 1], [], []>} : vector<8x128xbf16>, vector<128x256xbf16>, vector<8x256xf32> -> vector<8x256xf32>
    %c0_6 = arith.constant 0 : index
    %c0_7 = arith.constant 0 : index
    %8 = vector.load %arg3[%c0_6, %c0_7] : memref<8x256xf32, #tpu.memory_space<vmem>>, vector<8x256xf32>
    tpu.vector_store %arg3[%c0_6, %c0_7], %7 {strides = array<i32>} : memref<8x256xf32, #tpu.memory_space<vmem>>, vector<8x256xf32>,
    %c8_i32 = arith.constant 8 : i32
    %9 = arith.muli %arg0, %c8_i32 : i32
    %10 = tpu.iota {dimensions = array<i32: 0>} : vector<8x1xi32>
    %11 = vector.broadcast %9 : i32 to vector<8x1xi32>
    %12 = arith.addi %11, %10 : vector<8x1xi32>
    %c20_i32 = arith.constant 20 : i32
    %13 = vector.broadcast %c20_i32 : i32 to vector<8x1xi32>
    %14 = arith.cmpi slt, %12, %13 : vector<8x1xi32>
    %15 = arith.extui %14 : vector<8x1xi1> to vector<8x1xi32>
    %16 = arith.sitofp %15 : vector<8x1xi32> to vector<8x1xf32>
    %17 = vector.broadcast %16 : vector<8x1xf32> to vector<8x256xf32>
    %18 = arith.mulf %7, %17 : vector<8x256xf32>
    %cst_8 = arith.constant dense<0.000000e+00> : vector<256xf32>
    %19 = vector.multi_reduction <add>, %18, %cst_8 [0] : vector<8x256xf32> to vector<256xf32>
    %20 = vector.shape_cast %19 : vector<256xf32> to vector<1x256xf32>
    %21 = arith.mulf %18, %7 : vector<8x256xf32>
    %cst_9 = arith.constant dense<0.000000e+00> : vector<256xf32>
    %22 = vector.multi_reduction <add>, %21, %cst_9 [0] : vector<8x256xf32> to vector<256xf32>
    %23 = vector.shape_cast %22 : vector<256xf32> to vector<1x256xf32>
    %24 = tpu.concatenate %20, %23 in 0 : vector<1x256xf32>, vector<1x256xf32> -> vector<2x256xf32>
    %25 = vector.shape_cast %24 : vector<2x256xf32> to vector<1x2x256xf32>
    %c0_10 = arith.constant 0 : index
    %c0_11 = arith.constant 0 : index
    %c0_12 = arith.constant 0 : index
    %26 = vector.load %arg4[%c0_10, %c0_11, %c0_12] : memref<1x2x256xf32, #tpu.memory_space<vmem>>, vector<1x2x256xf32>
    tpu.vector_store %arg4[%c0_10, %c0_11, %c0_12], %25 {strides = array<i32>} : memref<1x2x256xf32, #tpu.memory_space<vmem>>, vector<1x2x256xf32>,
    return
  }
  func.func @transform_0(%arg0: i32) -> (i32, i32, i32) {
    %c0_i32 = arith.constant 0 : i32
    %c0_i32_0 = arith.constant 0 : i32
    %c0_i32_1 = arith.constant 0 : i32
    return %arg0, %c0_i32, %c0_i32_0 : i32, i32, i32
  }
  func.func @transform_1(%arg0: i32) -> (i32, i32) {
    %c0_i32 = arith.constant 0 : i32
    %c0_i32_0 = arith.constant 0 : i32
    %c0_i32_1 = arith.constant 0 : i32
    return %c0_i32, %c0_i32_0 : i32, i32
  }
  func.func @transform_2(%arg0: i32) -> (i32, i32) {
    %c0_i32 = arith.constant 0 : i32
    %c0_i32_0 = arith.constant 0 : i32
    return %arg0, %c0_i32 : i32, i32
  }
  func.func @transform_3(%arg0: i32) -> (i32, i32, i32) {
    %c0_i32 = arith.constant 0 : i32
    %c0_i32_0 = arith.constant 0 : i32
    %c0_i32_1 = arith.constant 0 : i32
    return %arg0, %c0_i32, %c0_i32_0 : i32, i32, i32
  }
}

module attributes {stable_mosaic.version = 11 : i64} {
  func.func @_bn_relu_fc2_kernel(%arg0: i32, %arg1: memref<8x256xf32, #tpu.memory_space<vmem>>, %arg2: memref<1x256xf32, #tpu.memory_space<vmem>>, %arg3: memref<1x256xf32, #tpu.memory_space<vmem>>, %arg4: memref<256x128xbf16, #tpu.memory_space<vmem>>, %arg5: memref<1x128xf32, #tpu.memory_space<vmem>>, %arg6: memref<8x128xf32, #tpu.memory_space<vmem>>) attributes {dimension_semantics = [#tpu.dimension_semantics<parallel>], iteration_bounds = array<i64: 3>, scalar_prefetch = 0 : i64, scratch_operands = 0 : i64, tpu.core_type = #tpu.core_type<tc>, window_params = [{transform_indices = @transform_0, window_bounds = array<i64: 8, 256>}, {pipeline_mode = #tpu.pipeline_mode<synchronous>, transform_indices = @transform_1, window_bounds = array<i64: 1, 256>}, {pipeline_mode = #tpu.pipeline_mode<synchronous>, transform_indices = @transform_2, window_bounds = array<i64: 1, 256>}, {pipeline_mode = #tpu.pipeline_mode<synchronous>, transform_indices = @transform_3, window_bounds = array<i64: 256, 128>}, {pipeline_mode = #tpu.pipeline_mode<synchronous>, transform_indices = @transform_4, window_bounds = array<i64: 1, 128>}, {transform_indices = @transform_5, window_bounds = array<i64: 8, 128>}]} {
    %c0 = arith.constant 0 : index
    %c0_0 = arith.constant 0 : index
    %0 = vector.load %arg1[%c0, %c0_0] : memref<8x256xf32, #tpu.memory_space<vmem>>, vector<8x256xf32>
    %c0_1 = arith.constant 0 : index
    %c0_2 = arith.constant 0 : index
    %1 = vector.load %arg2[%c0_1, %c0_2] : memref<1x256xf32, #tpu.memory_space<vmem>>, vector<1x256xf32>
    %2 = vector.broadcast %1 : vector<1x256xf32> to vector<8x256xf32>
    %3 = arith.mulf %0, %2 : vector<8x256xf32>
    %c0_3 = arith.constant 0 : index
    %c0_4 = arith.constant 0 : index
    %4 = vector.load %arg3[%c0_3, %c0_4] : memref<1x256xf32, #tpu.memory_space<vmem>>, vector<1x256xf32>
    %5 = vector.broadcast %4 : vector<1x256xf32> to vector<8x256xf32>
    %6 = arith.addf %3, %5 : vector<8x256xf32>
    %cst = arith.constant 0.000000e+00 : f32
    %7 = vector.broadcast %cst : f32 to vector<8x256xf32>
    %8 = arith.maximumf %6, %7 : vector<8x256xf32>
    %9 = arith.truncf %8 : vector<8x256xf32> to vector<8x256xbf16>
    %c0_5 = arith.constant 0 : index
    %c0_6 = arith.constant 0 : index
    %10 = vector.load %arg4[%c0_5, %c0_6] : memref<256x128xbf16, #tpu.memory_space<vmem>>, vector<256x128xbf16>
    %cst_7 = arith.constant dense<0.000000e+00> : vector<8x128xf32>
    %11 = tpu.matmul %9, %10, %cst_7 {dimension_numbers = #tpu.dot_dimension_numbers<[1], [0], [0], [1], [0, 0, 1, 1], [], []>} : vector<8x256xbf16>, vector<256x128xbf16>, vector<8x128xf32> -> vector<8x128xf32>
    %c0_8 = arith.constant 0 : index
    %c0_9 = arith.constant 0 : index
    %12 = vector.load %arg5[%c0_8, %c0_9] : memref<1x128xf32, #tpu.memory_space<vmem>>, vector<1x128xf32>
    %13 = vector.broadcast %12 : vector<1x128xf32> to vector<8x128xf32>
    %14 = arith.addf %11, %13 : vector<8x128xf32>
    %c0_10 = arith.constant 0 : index
    %c0_11 = arith.constant 0 : index
    %15 = vector.load %arg6[%c0_10, %c0_11] : memref<8x128xf32, #tpu.memory_space<vmem>>, vector<8x128xf32>
    tpu.vector_store %arg6[%c0_10, %c0_11], %14 {strides = array<i32>} : memref<8x128xf32, #tpu.memory_space<vmem>>, vector<8x128xf32>,
    return
  }
  func.func @transform_0(%arg0: i32) -> (i32, i32) {
    %c0_i32 = arith.constant 0 : i32
    %c0_i32_0 = arith.constant 0 : i32
    return %arg0, %c0_i32 : i32, i32
  }
  func.func @transform_1(%arg0: i32) -> (i32, i32) {
    %c0_i32 = arith.constant 0 : i32
    %c0_i32_0 = arith.constant 0 : i32
    %c0_i32_1 = arith.constant 0 : i32
    return %c0_i32, %c0_i32_0 : i32, i32
  }
  func.func @transform_2(%arg0: i32) -> (i32, i32) {
    %c0_i32 = arith.constant 0 : i32
    %c0_i32_0 = arith.constant 0 : i32
    %c0_i32_1 = arith.constant 0 : i32
    return %c0_i32, %c0_i32_0 : i32, i32
  }
  func.func @transform_3(%arg0: i32) -> (i32, i32) {
    %c0_i32 = arith.constant 0 : i32
    %c0_i32_0 = arith.constant 0 : i32
    %c0_i32_1 = arith.constant 0 : i32
    return %c0_i32, %c0_i32_0 : i32, i32
  }
  func.func @transform_4(%arg0: i32) -> (i32, i32) {
    %c0_i32 = arith.constant 0 : i32
    %c0_i32_0 = arith.constant 0 : i32
    %c0_i32_1 = arith.constant 0 : i32
    return %c0_i32, %c0_i32_0 : i32, i32
  }
  func.func @transform_5(%arg0: i32) -> (i32, i32) {
    %c0_i32 = arith.constant 0 : i32
    %c0_i32_0 = arith.constant 0 : i32
    return %arg0, %c0_i32 : i32, i32
  }
}

</mosaic_0001>

<llo_original>
// kernel: nonlinear_neck_v2.3
$region0: #{nonlinear_neck_v2.3}
  #allocation0 [shape = 'u32[]', space=smem, size = 0x4, offset = 0x4, fixed_abs, tag = 'smem constant byte address 0x4 - core index']
  #allocation1 [shape = 'u32[144,128]{1,0:T(1,128)}', space=vmem, size = 0x12000, scoped, tag = 'internal scratch']
  %s0 = inlined_call_operand.vmem [shape: f32[24,256], index: 0, kind: input, shape index: {}]
  %s1 = inlined_call_operand.vmem [shape: f32[1,256], index: 1, kind: input, shape index: {}]
  %s2 = inlined_call_operand.vmem [shape: f32[1,256], index: 2, kind: input, shape index: {}]
  %s3 = inlined_call_operand.vmem [shape: bf16[256,128], index: 3, kind: input, shape index: {}]
  %s4 = inlined_call_operand.vmem [shape: f32[1,128], index: 4, kind: input, shape index: {}]
  %s5 = inlined_call_operand.hbm [shape: f32[24,128], index: 5, kind: output, shape index: {}]
  %s6 = sld [smem:[#allocation0]]
  $region53: #{nonlinear_neck_v2.3} parent=0
    _
  %s8 = ssub.s32 1, %s6
  %s9 = scalar_select 0, %s8, %s6
  $region1: #{nonlinear_neck_v2.3} parent=0
    #allocation2 [shape = 'u8[8192]{0}', space=vmem, size = 0x2000, scoped, tag = 'output window, operand 0']
    #allocation3 [shape = 's32[2]{0}', space=sflag, size = 0x8, scoped, tag = 'scoped memory for nonlinear_neck_v2.3']
    %10 = vsyncpa [#allocation3], 0
    %s11 = scalar_lea.sflag [#allocation3], 1
    %12 = vsyncpa %s11, 0
    loop: start=0, step=1, limit=5
    $region2: #{nonlinear_neck_v2.3} parent=1 // loop_pre_header
      _
    $region3: #{nonlinear_neck_v2.3} parent=1 // loop_header
      %s14 = sphi 0, %s18
      %p15 = scmp.ge.s32.totalorder %s14, 5
      %s24 = sphi 0, %s26
      %s27 = sphi 0, %s24
      %s28 = sphi 0, %s27
      %s44 = sphi 0, %s28
      %s48 = sphi 0, %s48
      %s50 = sphi 0, %s48
      %s51 = sphi 0, %s50
      %s65 = sphi 0, %s51
      %s69 = sphi 0, %s69
      %s71 = sphi 0, %s69
      %s72 = sphi 0, %s71
      %s86 = sphi 0, %s72
      %s90 = sphi 0, %s90
      %s92 = sphi 0, %s90
      %s93 = sphi 0, %s92
      %s107 = sphi 0, %s93
      %s111 = sphi 0, %s111
      %s113 = sphi 0, %s111
      %s114 = sphi 0, %s113
      %s128 = sphi 0, %s114
      %s134 = sphi 0, %s136
      %s137 = sphi 0, %s134
      %s138 = sphi 0, %s137
      %s154 = sphi 0, %s138
    $region4: #{nonlinear_neck_v2.3} parent=1 // loop_header_branch
      %17 = sbr.rel (%p15) target = $region8
    $region5: #{nonlinear_neck_v2.3} parent=1 // loop_body
      %s19 = ssub.s32 %s14, 1
      %s20 = ssub.s32 %s14, 2
      %s21 = sadd.s32 %s14, 1
      %s22 = ssub.s32 %s14, %s21
      %p23 = scmp.eq.s32.totalorder %s22, 0
      %s25 = sadd.s32 %s24, 1
      %s26 = scalar_select %p23, %s24, %s25
      %p29 = pneg %p23
      %p30 = scmp.eq.s32.totalorder %s14, 2
      %p31 = por %p29, %p30
      %p32 = scmp.ne.s32.totalorder %s24, %s27
      %p33 = scmp.eq.s32.totalorder %s14, 0
      %p34 = por %p32, %p33
      %p35 = scmp.ne.s32.totalorder %s24, %s27
      %p36 = scmp.eq.s32.totalorder %s19, 2
      %p37 = por %p35, %p36
      %p38 = scmp.ne.s32.totalorder %s27, %s28
      %p39 = scmp.eq.s32.totalorder %s19, 0
      %p40 = por %p38, %p39
      %p41 = scmp.ne.s32.totalorder %s27, %s28
      %p42 = scmp.eq.s32.totalorder %s20, 2
      %p43 = por %p41, %p42
      %p45 = scmp.ne.s32.totalorder %s28, %s44
      %p46 = scmp.eq.s32.totalorder %s20, 0
      %p47 = por %p45, %p46
      %s49 = sadd.s32 %s48, 1
      %p52 = scmp.eq.s32.totalorder %s14, 2
      %p53 = scmp.ne.s32.totalorder %s48, %s50
      %p54 = scmp.eq.s32.totalorder %s14, 0
      %p55 = por %p53, %p54
      %p56 = scmp.ne.s32.totalorder %s48, %s50
      %p57 = scmp.eq.s32.totalorder %s19, 2
      %p58 = por %p56, %p57
      %p59 = scmp.ne.s32.totalorder %s50, %s51
      %p60 = scmp.eq.s32.totalorder %s19, 0
      %p61 = por %p59, %p60
      %p62 = scmp.ne.s32.totalorder %s50, %s51
      %p63 = scmp.eq.s32.totalorder %s20, 2
      %p64 = por %p62, %p63
      %p66 = scmp.ne.s32.totalorder %s51, %s65
      %p67 = scmp.eq.s32.totalorder %s20, 0
      %p68 = por %p66, %p67
      %s70 = sadd.s32 %s69, 1
      %p73 = scmp.eq.s32.totalorder %s14, 2
      %p74 = scmp.ne.s32.totalorder %s69, %s71
      %p75 = scmp.eq.s32.totalorder %s14, 0
      %p76 = por %p74, %p75
      %p77 = scmp.ne.s32.totalorder %s69, %s71
      %p78 = scmp.eq.s32.totalorder %s19, 2
      %p79 = por %p77, %p78
      %p80 = scmp.ne.s32.totalorder %s71, %s72
      %p81 = scmp.eq.s32.totalorder %s19, 0
      %p82 = por %p80, %p81
      %p83 = scmp.ne.s32.totalorder %s71, %s72
      %p84 = scmp.eq.s32.totalorder %s20, 2
      %p85 = por %p83, %p84
      %p87 = scmp.ne.s32.totalorder %s72, %s86
      %p88 = scmp.eq.s32.totalorder %s20, 0
      %p89 = por %p87, %p88
      %s91 = sadd.s32 %s90, 1
      %p94 = scmp.eq.s32.totalorder %s14, 2
      %p95 = scmp.ne.s32.totalorder %s90, %s92
      %p96 = scmp.eq.s32.totalorder %s14, 0
      %p97 = por %p95, %p96
      %p98 = scmp.ne.s32.totalorder %s90, %s92
      %p99 = scmp.eq.s32.totalorder %s19, 2
      %p100 = por %p98, %p99
      %p101 = scmp.ne.s32.totalorder %s92, %s93
      %p102 = scmp.eq.s32.totalorder %s19, 0
      %p103 = por %p101, %p102
      %p104 = scmp.ne.s32.totalorder %s92, %s93
      %p105 = scmp.eq.s32.totalorder %s20, 2
      %p106 = por %p104, %p105
      %p108 = scmp.ne.s32.totalorder %s93, %s107
      %p109 = scmp.eq.s32.totalorder %s20, 0
      %p110 = por %p108, %p109
      %s112 = sadd.s32 %s111, 1
      %p115 = scmp.eq.s32.totalorder %s14, 2
      %p116 = scmp.ne.s32.totalorder %s111, %s113
      %p117 = scmp.eq.s32.totalorder %s14, 0
      %p118 = por %p116, %p117
      %p119 = scmp.ne.s32.totalorder %s111, %s113
      %p120 = scmp.eq.s32.totalorder %s19, 2
      %p121 = por %p119, %p120
      %p122 = scmp.ne.s32.totalorder %s113, %s114
      %p123 = scmp.eq.s32.totalorder %s19, 0
      %p124 = por %p122, %p123
      %p125 = scmp.ne.s32.totalorder %s113, %s114
      %p126 = scmp.eq.s32.totalorder %s20, 2
      %p127 = por %p125, %p126
      %p129 = scmp.ne.s32.totalorder %s114, %s128
      %p130 = scmp.eq.s32.totalorder %s20, 0
      %p131 = por %p129, %p130
      %s132 = ssub.s32 %s14, %s21
      %p133 = scmp.eq.s32.totalorder %s132, 0
      %s135 = sadd.s32 %s134, 1
      %s136 = scalar_select %p133, %s134, %s135
      %p139 = pneg %p133
      %p140 = scmp.eq.s32.totalorder %s14, 2
      %p141 = por %p139, %p140
      %p142 = scmp.ne.s32.totalorder %s134, %s137
      %p143 = scmp.eq.s32.totalorder %s14, 0
      %p144 = por %p142, %p143
      %p145 = scmp.ne.s32.totalorder %s134, %s137
      %p146 = scmp.eq.s32.totalorder %s19, 2
      %p147 = por %p145, %p146
      %p148 = scmp.ne.s32.totalorder %s137, %s138
      %p149 = scmp.eq.s32.totalorder %s19, 0
      %p150 = por %p148, %p149
      %p151 = scmp.ne.s32.totalorder %s137, %s138
      %p152 = scmp.eq.s32.totalorder %s20, 2
      %p153 = por %p151, %p152
      %p155 = scmp.ne.s32.totalorder %s138, %s154
      %p156 = scmp.eq.s32.totalorder %s20, 0
      %p157 = por %p155, %p156
      %p158 = scmp.le.s32.totalorder 1, %s14
      %p159 = scmp.lt.s32.totalorder %s14, 4
      %p160 = pnand %p158, %p159
      %p161 = pneg %p160
      // Predicated region
      $region9: #{nonlinear_neck_v2.3} parent=5 // pred_check
        _
      $region10: #{nonlinear_neck_v2.3} parent=5 // pred_check_branch
        %163 = sbr.rel (%p160) target = $region12
      $region11: #{nonlinear_neck_v2.3} parent=5 // pred_region
        %s164 = ssub.s32 %s14, 1
        // Predicated region
        $region13: #{nonlinear_neck_v2.3} parent=11 // pred_check
          %p165 = pneg %p61
        $region14: #{nonlinear_neck_v2.3} parent=11 // pred_check_branch
          %167 = sbr.rel (%p165) target = $region16
        $region15: #{nonlinear_neck_v2.3} parent=11 // pred_region
          _
        $region16: #{nonlinear_neck_v2.3} parent=11 // pred_fallthru
          _
        // Predicated region
        $region17: #{nonlinear_neck_v2.3} parent=11 // pred_check
          %p168 = pneg %p82
        $region18: #{nonlinear_neck_v2.3} parent=11 // pred_check_branch
          %170 = sbr.rel (%p168) target = $region20
        $region19: #{nonlinear_neck_v2.3} parent=11 // pred_region
          _
        $region20: #{nonlinear_neck_v2.3} parent=11 // pred_fallthru
          _
        // Predicated region
        $region21: #{nonlinear_neck_v2.3} parent=11 // pred_check
          %p171 = pneg %p103
        $region22: #{nonlinear_neck_v2.3} parent=11 // pred_check_branch
          %173 = sbr.rel (%p171) target = $region24
        $region23: #{nonlinear_neck_v2.3} parent=11 // pred_region
          _
        $region24: #{nonlinear_neck_v2.3} parent=11 // pred_fallthru
          _
        // Predicated region
        $region25: #{nonlinear_neck_v2.3} parent=11 // pred_check
          %p174 = pneg %p124
        $region26: #{nonlinear_neck_v2.3} parent=11 // pred_check_branch
          %176 = sbr.rel (%p174) target = $region28
        $region27: #{nonlinear_neck_v2.3} parent=11 // pred_region
          _
        $region28: #{nonlinear_neck_v2.3} parent=11 // pred_fallthru
          _
      $region12: #{nonlinear_neck_v2.3} parent=5 // pred_fallthru
        _
      %p177 = scmp.lt.s32.totalorder %s14, 3
      // Predicated region
      $region29: #{nonlinear_neck_v2.3} parent=5 // pred_check
        %p178 = pneg %p177
      $region30: #{nonlinear_neck_v2.3} parent=5 // pred_check_branch
        %180 = sbr.rel (%p178) target = $region32
      $region31: #{nonlinear_neck_v2.3} parent=5 // pred_region
        // Predicated region
        $region33: #{nonlinear_neck_v2.3} parent=31 // pred_check
          %p181 = pneg %p34
        $region34: #{nonlinear_neck_v2.3} parent=31 // pred_check_branch
          %183 = sbr.rel (%p181) target = $region36
        $region35: #{nonlinear_neck_v2.3} parent=31 // pred_region
          %p184 = scmp.lt.s32.totalorder %s14, 2
          %s185 = scalar_select %p184, %s14, 2
          %s186 = smul.addr %s185, 2
          %s187 = smul.addr %s186, 8
          %s188 = scalar_lea.vmem %s0, %s187
        $region36: #{nonlinear_neck_v2.3} parent=31 // pred_fallthru
          _
      $region32: #{nonlinear_neck_v2.3} parent=5 // pred_fallthru
        _
      %p189 = scmp.le.s32.totalorder 1, %s14
      %p190 = scmp.lt.s32.totalorder %s14, 4
      %p191 = pnand %p189, %p190
      %p192 = pneg %p191
      // Predicated region
      $region37: #{nonlinear_neck_v2.3} parent=5 // pred_check
        _
      $region38: #{nonlinear_neck_v2.3} parent=5 // pred_check_branch
        %194 = sbr.rel (%p191) target = $region40
      $region39: #{nonlinear_neck_v2.3} parent=5 // pred_region
        %s195 = ssub.s32 %s14, 1
        %p196 = scmp.lt.s32.totalorder %s19, 2
        %s197 = scalar_select %p196, %s19, 2
        %s198 = smul.addr %s197, 2
        %s199 = smul.addr %s198, 8
        %s200 = scalar_lea.vmem %s0, %s199
        %p201 = pneg %p40
        %p202 = pneg %p37
        %p203 = pneg %p61
        %p204 = pneg %p58
        %p205 = pneg %p82
        %p206 = pneg %p79
        %p207 = pneg %p103
        %p208 = pneg %p100
        %p209 = pneg %p124
        %p210 = pneg %p121
        %p211 = pneg %p150
        %p212 = pneg %p147
        %s213 = sand.u32 %s137, 1
        %s214 = scalar_lea.sflag [#allocation3], %s213
        %s215 = sand.u32 %s137, 1
        %s216 = smul.addr %s215, 8
        %s217 = scalar_lea.vmem [#allocation2], %s216
        %p218 = scmp.lt.s32.totalorder %s19, 2
        %s219 = scalar_select %p218, %s19, 2
        %s220 = smul.addr %s219, 2
        %s221 = smul.addr %s220, 8
        %s222 = scalar_lea.vmem %s0, %s221
        %v224 = vld [vmem:[%s222] sm:$0xff]
        %v225 = vld [vmem:[%s222 + $0x8] sm:$0xff]
        %v226 = vld [vmem:[%s1] sm:$0x3]
        %v228 = vlaneseq
        %v229 = vshrl.u32 %v228, 7
        %v230 = vsub.s32 0, %v229
        %v231 = vrot.slane %v226, %v230
        %v232 = vlaneseq
        %v233 = vshrl.u32 %v232, 7
        %v234 = vsub.s32 1, %v233
        %v235 = vrot.slane %v226, %v234
        %v238 = vmul.f32 %v224, %v231
        %v239 = vmul.f32 %v225, %v235
        %v240 = vld [vmem:[%s2] sm:$0x3]
        %v242 = vlaneseq
        %v243 = vshrl.u32 %v242, 7
        %v244 = vsub.s32 0, %v243
        %v245 = vrot.slane %v240, %v244
        %v246 = vlaneseq
        %v247 = vshrl.u32 %v246, 7
        %v248 = vsub.s32 1, %v247
        %v249 = vrot.slane %v240, %v248
        %v252 = vadd.f32 %v238, %v245
        %v253 = vadd.f32 %v239, %v249
        %v254 = vmax.f32 %v252, 0.0
        %v255 = vmax.f32 %v253, 0.0
        %v256 = vpack.c.bf16 %v254, %v254
        %v257 = vpack.c.bf16 %v255, %v255
        %v258 = vld [vmem:[%s3] sm:$0xf]
        %v259 = vld [vmem:[%s3 + $0x4] sm:$0xf]
        %v260 = vld [vmem:[%s3 + $0x8] sm:$0xf]
        %v261 = vld [vmem:[%s3 + $0xc] sm:$0xf]
        %v262 = vld [vmem:[%s3 + $0x10] sm:$0xf]
        %v263 = vld [vmem:[%s3 + $0x14] sm:$0xf]
        %v264 = vld [vmem:[%s3 + $0x18] sm:$0xf]
        %v265 = vld [vmem:[%s3 + $0x1c] sm:$0xf]
        %v266 = vld [vmem:[%s3 + $0x20] sm:$0xf]
        %v267 = vld [vmem:[%s3 + $0x24] sm:$0xf]
        %v268 = vld [vmem:[%s3 + $0x28] sm:$0xf]
        %v269 = vld [vmem:[%s3 + $0x2c] sm:$0xf]
        %v270 = vld [vmem:[%s3 + $0x30] sm:$0xf]
        %v271 = vld [vmem:[%s3 + $0x34] sm:$0xf]
        %v272 = vld [vmem:[%s3 + $0x38] sm:$0xf]
        %v273 = vld [vmem:[%s3 + $0x3c] sm:$0xf]
        %v274 = vld [vmem:[%s3 + $0x40] sm:$0xf]
        %v275 = vld [vmem:[%s3 + $0x44] sm:$0xf]
        %v276 = vld [vmem:[%s3 + $0x48] sm:$0xf]
        %v277 = vld [vmem:[%s3 + $0x4c] sm:$0xf]
        %v278 = vld [vmem:[%s3 + $0x50] sm:$0xf]
        %v279 = vld [vmem:[%s3 + $0x54] sm:$0xf]
        %v280 = vld [vmem:[%s3 + $0x58] sm:$0xf]
        %v281 = vld [vmem:[%s3 + $0x5c] sm:$0xf]
        %v282 = vld [vmem:[%s3 + $0x60] sm:$0xf]
        %v283 = vld [vmem:[%s3 + $0x64] sm:$0xf]
        %v284 = vld [vmem:[%s3 + $0x68] sm:$0xf]
        %v285 = vld [vmem:[%s3 + $0x6c] sm:$0xf]
        %v286 = vld [vmem:[%s3 + $0x70] sm:$0xf]
        %v287 = vld [vmem:[%s3 + $0x74] sm:$0xf]
        %v288 = vld [vmem:[%s3 + $0x78] sm:$0xf]
        %v289 = vld [vmem:[%s3 + $0x7c] sm:$0xf]
        %v290 = vld [vmem:[%s4] sm:$0x1]
        %v292 = vlaneseq
        %v293 = vshrl.u32 %v292, 7
        %v294 = vsub.s32 0, %v293
        %v295 = vrot.slane %v290, %v294
        %v329 = vunpack.c.l.b16 %v258
        %v330 = vunpack.c.l.b16 %v259
        %v331 = vunpack.c.l.b16 %v260
        %v332 = vunpack.c.l.b16 %v261
        %v333 = vunpack.c.l.b16 %v262
        %v334 = vunpack.c.l.b16 %v263
        %v335 = vunpack.c.l.b16 %v264
        %v336 = vunpack.c.l.b16 %v265
        %v337 = vunpack.c.l.b16 %v266
        %v338 = vunpack.c.l.b16 %v267
        %v339 = vunpack.c.l.b16 %v268
        %v340 = vunpack.c.l.b16 %v269
        %v341 = vunpack.c.l.b16 %v270
        %v342 = vunpack.c.l.b16 %v271
        %v343 = vunpack.c.l.b16 %v272
        %v344 = vunpack.c.l.b16 %v273
        %v345 = vunpack.c.l.b16 %v274
        %v346 = vunpack.c.l.b16 %v275
        %v347 = vunpack.c.l.b16 %v276
        %v348 = vunpack.c.l.b16 %v277
        %v349 = vunpack.c.l.b16 %v278
        %v350 = vunpack.c.l.b16 %v279
        %v351 = vunpack.c.l.b16 %v280
        %v352 = vunpack.c.l.b16 %v281
        %v353 = vunpack.c.l.b16 %v282
        %v354 = vunpack.c.l.b16 %v283
        %v355 = vunpack.c.l.b16 %v284
        %v356 = vunpack.c.l.b16 %v285
        %v357 = vunpack.c.l.b16 %v286
        %v358 = vunpack.c.l.b16 %v287
        %v359 = vunpack.c.l.b16 %v288
        %v360 = vunpack.c.l.b16 %v289
        %v361 = vpack.c.b16 %v330, %v329
        %v362 = vpack.c.b16 %v332, %v331
        %v363 = vpack.c.b16 %v334, %v333
        %v364 = vpack.c.b16 %v336, %v335
        %v365 = vpack.c.b16 %v338, %v337
        %v366 = vpack.c.b16 %v340, %v339
        %v367 = vpack.c.b16 %v342, %v341
        %v368 = vpack.c.b16 %v344, %v343
        %v369 = vpack.c.b16 %v346, %v345
        %v370 = vpack.c.b16 %v348, %v347
        %v371 = vpack.c.b16 %v350, %v349
        %v372 = vpack.c.b16 %v352, %v351
        %v373 = vpack.c.b16 %v354, %v353
        %v374 = vpack.c.b16 %v356, %v355
        %v375 = vpack.c.b16 %v358, %v357
        %v376 = vpack.c.b16 %v360, %v359
        %393 = vmatprep.subr.bf16.mxu0 0
        %394 = vmatpush1.bf16.msra.mxu0 %v361
        %395 = vmatprep.subr.bf16.mxu0 0
        %396 = vmatpush1.bf16.msra.mxu0 %v362
        %397 = vmatprep.subr.bf16.mxu0 0
        %398 = vmatpush1.bf16.msra.mxu0 %v363
        %399 = vmatprep.subr.bf16.mxu0 0
        %400 = vmatpush1.bf16.msra.mxu0 %v364
        %401 = vmatprep.subr.bf16.mxu0 0
        %402 = vmatpush1.bf16.msra.mxu0 %v365
        %403 = vmatprep.subr.bf16.mxu0 0
        %404 = vmatpush1.bf16.msra.mxu0 %v366
        %405 = vmatprep.subr.bf16.mxu0 0
        %406 = vmatpush1.bf16.msra.mxu0 %v367
        %407 = vmatprep.subr.bf16.mxu0 0
        %408 = vmatpush1.bf16.msra.mxu0 %v368
        %409 = vmatprep.subr.bf16.mxu0 0
        %410 = vmatpush1.bf16.msra.mxu0 %v369
        %411 = vmatprep.subr.bf16.mxu0 0
        %412 = vmatpush1.bf16.msra.mxu0 %v370
        %413 = vmatprep.subr.bf16.mxu0 0
        %414 = vmatpush1.bf16.msra.mxu0 %v371
        %415 = vmatprep.subr.bf16.mxu0 0
        %416 = vmatpush1.bf16.msra.mxu0 %v372
        %417 = vmatprep.subr.bf16.mxu0 0
        %418 = vmatpush1.bf16.msra.mxu0 %v373
        %419 = vmatprep.subr.bf16.mxu0 0
        %420 = vmatpush1.bf16.msra.mxu0 %v374
        %421 = vmatprep.subr.bf16.mxu0 0
        %422 = vmatpush1.bf16.msra.mxu0 %v375
        %423 = vmatprep.subr.bf16.mxu0 0
        %424 = vmatpush1.bf16.msra.mxu0 %v376
        %425 = vmatprep.mubr.bf16.mxu0 %v257
        %426 = vmatmul.mubr.bf16.gmra.mrb[0].mxu0 %v256
        %v427 = vpop.f32.mrb[0].mxu0
        %v428 = vadd.f32 %v295, %v427
        %v429 = vpop.f32.mrb[0].mxu0
        %v430 = vpop.f32.mrb[0].mxu0
        %v431 = vpop.f32.mrb[0].mxu0
        %432 = vdwg.mxu0
        %433 = vst [vmem:[%s217] sm:$0xff] %v428
        %s434 = sand.u32 %s137, 1
        %s435 = scalar_lea.sflag [#allocation3], %s434
        %s436 = sand.u32 %s137, 1
        %s437 = smul.addr %s436, 8
        %s438 = scalar_lea.vmem [#allocation2], %s437
        // Predicated region
        $region41: #{nonlinear_neck_v2.3} parent=39 // pred_check
          %p439 = pneg %p147
        $region42: #{nonlinear_neck_v2.3} parent=39 // pred_check_branch
          %441 = sbr.rel (%p439) target = $region44
        $region43: #{nonlinear_neck_v2.3} parent=39 // pred_region
          %s443 = ssub.s32 128, 128
          %444 = vsyncadd %s435, %s443
          %s445 = smul.addr %s19, 128
          %s446 = scalar_lea.hbm %s5, %s445
          %s448 = sshll.u32 %s438, 4
          %s449 = int_to_ptr.vmem [resolvable:$true] %s448
          %451 = dma.vmem_to_hbm [thread:$0]  %s449, 128, %s446, %s435
        $region44: #{nonlinear_neck_v2.3} parent=39 // pred_fallthru
          _
      $region40: #{nonlinear_neck_v2.3} parent=5 // pred_fallthru
        _
      %p452 = scmp.le.s32.totalorder 2, %s14
      // Predicated region
      $region45: #{nonlinear_neck_v2.3} parent=5 // pred_check
        %p453 = pneg %p452
      $region46: #{nonlinear_neck_v2.3} parent=5 // pred_check_branch
        %455 = sbr.rel (%p453) target = $region48
      $region47: #{nonlinear_neck_v2.3} parent=5 // pred_region
        %s456 = ssub.s32 %s14, 2
        // Predicated region
        $region49: #{nonlinear_neck_v2.3} parent=47 // pred_check
          %p457 = pneg %p153
        $region50: #{nonlinear_neck_v2.3} parent=47 // pred_check_branch
          %459 = sbr.rel (%p457) target = $region52
        $region51: #{nonlinear_neck_v2.3} parent=47 // pred_region
          %s460 = sand.u32 %s138, 1
          %s461 = scalar_lea.sflag [#allocation3], %s460
          %s462 = sand.u32 %s138, 1
          %s463 = smul.addr %s462, 8
          %s464 = scalar_lea.vmem [#allocation2], %s463
          %465 = dma.done %s461, 128
        $region52: #{nonlinear_neck_v2.3} parent=47 // pred_fallthru
          _
      $region48: #{nonlinear_neck_v2.3} parent=5 // pred_fallthru
        _
    $region6: #{nonlinear_neck_v2.3} parent=1 // loop_footer
      %s18 = sadd.s32 1, %s14
    $region7: #{nonlinear_neck_v2.3} parent=1 // loop_footer_branch
      %13 = sbr.rel target = $region3
    $region8: #{nonlinear_neck_v2.3} parent=1 // loop_exit
      _
    %466 = vsyncpa [#allocation3], 1
    %s467 = scalar_lea.sflag [#allocation3], 1
    %468 = vsyncpa %s467, 1

// kernel: nonlinear_neck_v2.2
$region0: #{nonlinear_neck_v2.2}
  #allocation0 [shape = 'u32[]', space=smem, size = 0x4, offset = 0x4, fixed_abs, tag = 'smem constant byte address 0x4 - core index']
  #allocation1 [shape = 'u32[144,128]{1,0:T(1,128)}', space=vmem, size = 0x12000, scoped, tag = 'internal scratch']
  %s0 = inlined_call_operand.vmem [shape: bf16[24,16,128], index: 0, kind: input, shape index: {}]
  %s1 = inlined_call_operand.vmem [shape: bf16[128,256], index: 1, kind: input, shape index: {}]
  %s2 = inlined_call_operand.vmem [shape: f32[24,256], index: 2, kind: output, shape index: {0}]
  %s3 = inlined_call_operand.vmem [shape: f32[3,2,256], index: 3, kind: output, shape index: {1}]
  %4 = xla_tuple %s2, %s3
  %s5 = sld [smem:[#allocation0]]
  $region49: #{nonlinear_neck_v2.2} parent=0
    _
  %s7 = ssub.s32 1, %s5
  %s8 = scalar_select 0, %s7, %s5
  loop: start=0, step=1, limit=5
  $region2: #{nonlinear_neck_v2.2} parent=0 // loop_pre_header
    _
  $region3: #{nonlinear_neck_v2.2} parent=0 // loop_header
    %s10 = sphi 0, %s14
    %p11 = scmp.ge.s32.totalorder %s10, 5
    %s20 = sphi 0, %s22
    %s23 = sphi 0, %s20
    %s24 = sphi 0, %s23
    %s40 = sphi 0, %s24
    %s44 = sphi 0, %s44
    %s46 = sphi 0, %s44
    %s47 = sphi 0, %s46
    %s61 = sphi 0, %s47
    %s67 = sphi 0, %s69
    %s70 = sphi 0, %s67
    %s71 = sphi 0, %s70
    %s87 = sphi 0, %s71
    %s93 = sphi 0, %s95
    %s96 = sphi 0, %s93
    %s97 = sphi 0, %s96
    %s113 = sphi 0, %s97
  $region4: #{nonlinear_neck_v2.2} parent=0 // loop_header_branch
    %13 = sbr.rel (%p11) target = $region8
  $region5: #{nonlinear_neck_v2.2} parent=0 // loop_body
    %s15 = ssub.s32 %s10, 1
    %s16 = ssub.s32 %s10, 2
    %s17 = sadd.s32 %s10, 1
    %s18 = ssub.s32 %s10, %s17
    %p19 = scmp.eq.s32.totalorder %s18, 0
    %s21 = sadd.s32 %s20, 1
    %s22 = scalar_select %p19, %s20, %s21
    %p25 = pneg %p19
    %p26 = scmp.eq.s32.totalorder %s10, 2
    %p27 = por %p25, %p26
    %p28 = scmp.ne.s32.totalorder %s20, %s23
    %p29 = scmp.eq.s32.totalorder %s10, 0
    %p30 = por %p28, %p29
    %p31 = scmp.ne.s32.totalorder %s20, %s23
    %p32 = scmp.eq.s32.totalorder %s15, 2
    %p33 = por %p31, %p32
    %p34 = scmp.ne.s32.totalorder %s23, %s24
    %p35 = scmp.eq.s32.totalorder %s15, 0
    %p36 = por %p34, %p35
    %p37 = scmp.ne.s32.totalorder %s23, %s24
    %p38 = scmp.eq.s32.totalorder %s16, 2
    %p39 = por %p37, %p38
    %p41 = scmp.ne.s32.totalorder %s24, %s40
    %p42 = scmp.eq.s32.totalorder %s16, 0
    %p43 = por %p41, %p42
    %s45 = sadd.s32 %s44, 1
    %p48 = scmp.eq.s32.totalorder %s10, 2
    %p49 = scmp.ne.s32.totalorder %s44, %s46
    %p50 = scmp.eq.s32.totalorder %s10, 0
    %p51 = por %p49, %p50
    %p52 = scmp.ne.s32.totalorder %s44, %s46
    %p53 = scmp.eq.s32.totalorder %s15, 2
    %p54 = por %p52, %p53
    %p55 = scmp.ne.s32.totalorder %s46, %s47
    %p56 = scmp.eq.s32.totalorder %s15, 0
    %p57 = por %p55, %p56
    %p58 = scmp.ne.s32.totalorder %s46, %s47
    %p59 = scmp.eq.s32.totalorder %s16, 2
    %p60 = por %p58, %p59
    %p62 = scmp.ne.s32.totalorder %s47, %s61
    %p63 = scmp.eq.s32.totalorder %s16, 0
    %p64 = por %p62, %p63
    %s65 = ssub.s32 %s10, %s17
    %p66 = scmp.eq.s32.totalorder %s65, 0
    %s68 = sadd.s32 %s67, 1
    %s69 = scalar_select %p66, %s67, %s68
    %p72 = pneg %p66
    %p73 = scmp.eq.s32.totalorder %s10, 2
    %p74 = por %p72, %p73
    %p75 = scmp.ne.s32.totalorder %s67, %s70
    %p76 = scmp.eq.s32.totalorder %s10, 0
    %p77 = por %p75, %p76
    %p78 = scmp.ne.s32.totalorder %s67, %s70
    %p79 = scmp.eq.s32.totalorder %s15, 2
    %p80 = por %p78, %p79
    %p81 = scmp.ne.s32.totalorder %s70, %s71
    %p82 = scmp.eq.s32.totalorder %s15, 0
    %p83 = por %p81, %p82
    %p84 = scmp.ne.s32.totalorder %s70, %s71
    %p85 = scmp.eq.s32.totalorder %s16, 2
    %p86 = por %p84, %p85
    %p88 = scmp.ne.s32.totalorder %s71, %s87
    %p89 = scmp.eq.s32.totalorder %s16, 0
    %p90 = por %p88, %p89
    %s91 = ssub.s32 %s10, %s17
    %p92 = scmp.eq.s32.totalorder %s91, 0
    %s94 = sadd.s32 %s93, 1
    %s95 = scalar_select %p92, %s93, %s94
    %p98 = pneg %p92
    %p99 = scmp.eq.s32.totalorder %s10, 2
    %p100 = por %p98, %p99
    %p101 = scmp.ne.s32.totalorder %s93, %s96
    %p102 = scmp.eq.s32.totalorder %s10, 0
    %p103 = por %p101, %p102
    %p104 = scmp.ne.s32.totalorder %s93, %s96
    %p105 = scmp.eq.s32.totalorder %s15, 2
    %p106 = por %p104, %p105
    %p107 = scmp.ne.s32.totalorder %s96, %s97
    %p108 = scmp.eq.s32.totalorder %s15, 0
    %p109 = por %p107, %p108
    %p110 = scmp.ne.s32.totalorder %s96, %s97
    %p111 = scmp.eq.s32.totalorder %s16, 2
    %p112 = por %p110, %p111
    %p114 = scmp.ne.s32.totalorder %s97, %s113
    %p115 = scmp.eq.s32.totalorder %s16, 0
    %p116 = por %p114, %p115
    %p117 = scmp.le.s32.totalorder 1, %s10
    %p118 = scmp.lt.s32.totalorder %s10, 4
    %p119 = pnand %p117, %p118
    %p120 = pneg %p119
    // Predicated region
    $region9: #{nonlinear_neck_v2.2} parent=5 // pred_check
      _
    $region10: #{nonlinear_neck_v2.2} parent=5 // pred_check_branch
      %122 = sbr.rel (%p119) target = $region12
    $region11: #{nonlinear_neck_v2.2} parent=5 // pred_region
      %s123 = ssub.s32 %s10, 1
      // Predicated region
      $region13: #{nonlinear_neck_v2.2} parent=11 // pred_check
        %p124 = pneg %p57
      $region14: #{nonlinear_neck_v2.2} parent=11 // pred_check_branch
        %126 = sbr.rel (%p124) target = $region16
      $region15: #{nonlinear_neck_v2.2} parent=11 // pred_region
        _
      $region16: #{nonlinear_neck_v2.2} parent=11 // pred_fallthru
        _
    $region12: #{nonlinear_neck_v2.2} parent=5 // pred_fallthru
      _
    %p127 = scmp.lt.s32.totalorder %s10, 3
    // Predicated region
    $region17: #{nonlinear_neck_v2.2} parent=5 // pred_check
      %p128 = pneg %p127
    $region18: #{nonlinear_neck_v2.2} parent=5 // pred_check_branch
      %130 = sbr.rel (%p128) target = $region20
    $region19: #{nonlinear_neck_v2.2} parent=5 // pred_region
      // Predicated region
      $region21: #{nonlinear_neck_v2.2} parent=19 // pred_check
        %p131 = pneg %p30
      $region22: #{nonlinear_neck_v2.2} parent=19 // pred_check_branch
        %133 = sbr.rel (%p131) target = $region24
      $region23: #{nonlinear_neck_v2.2} parent=19 // pred_region
        %s134 = smul.u32 8, %s10
        %p135 = scmp.lt.s32.totalorder %s134, 23
        %s136 = scalar_select %p135, %s134, 23
        %s137 = smul.addr %s136, 2
        %s138 = smul.addr %s137, 4
        %s139 = scalar_lea.vmem %s0, %s138
        %s140 = smul.u32 8, %s10
      $region24: #{nonlinear_neck_v2.2} parent=19 // pred_fallthru
        _
    $region20: #{nonlinear_neck_v2.2} parent=5 // pred_fallthru
      _
    %p141 = scmp.le.s32.totalorder 1, %s10
    %p142 = scmp.lt.s32.totalorder %s10, 4
    %p143 = pnand %p141, %p142
    %p144 = pneg %p143
    // Predicated region
    $region25: #{nonlinear_neck_v2.2} parent=5 // pred_check
      _
    $region26: #{nonlinear_neck_v2.2} parent=5 // pred_check_branch
      %146 = sbr.rel (%p143) target = $region28
    $region27: #{nonlinear_neck_v2.2} parent=5 // pred_region
      %s147 = ssub.s32 %s10, 1
      %s148 = smul.u32 8, %s15
      %p149 = scmp.lt.s32.totalorder %s148, 23
      %s150 = scalar_select %p149, %s148, 23
      %s151 = smul.addr %s150, 2
      %s152 = smul.addr %s151, 4
      %s153 = scalar_lea.vmem %s0, %s152
      %p154 = pneg %p36
      %p155 = pneg %p33
      %p156 = pneg %p57
      %p157 = pneg %p54
      %p158 = pneg %p83
      %p159 = pneg %p80
      %p160 = scmp.lt.s32.totalorder %s15, 2
      %s161 = scalar_select %p160, %s15, 2
      %s162 = smul.addr %s161, 2
      %s163 = smul.addr %s162, 8
      %s164 = scalar_lea.vmem %s2, %s163
      %p165 = pneg %p109
      %p166 = pneg %p106
      %p167 = scmp.lt.s32.totalorder %s15, 2
      %s168 = scalar_select %p167, %s15, 2
      %s169 = smul.addr %s168, 2
      %s170 = smul.addr %s169, 2
      %s171 = scalar_lea.vmem %s3, %s170
      %s172 = smul.u32 8, %s15
      %p173 = scmp.lt.s32.totalorder %s172, 23
      %s174 = scalar_select %p173, %s172, 23
      %s175 = smul.addr %s174, 2
      %s176 = smul.addr %s175, 4
      %s177 = scalar_lea.vmem %s0, %s176
      %s178 = smul.u32 8, %s15
      %p179 = scmp.lt.s32.totalorder %s15, 2
      %s180 = scalar_select %p179, %s15, 2
      %s181 = smul.addr %s180, 2
      %s182 = smul.addr %s181, 8
      %s183 = scalar_lea.vmem %s2, %s182
      %p184 = scmp.lt.s32.totalorder %s15, 2
      %s185 = scalar_select %p184, %s15, 2
      %s186 = smul.addr %s185, 2
      %s187 = smul.addr %s186, 2
      %s188 = scalar_lea.vmem %s3, %s187
      %v190 = vld [vmem:[%s177] sm:$0xf]
      %v191 = vld [vmem:[%s177 + $0x4] sm:$0xf]
      %v192 = vld [vmem:[%s177 + $0x8] sm:$0xf]
      %v193 = vld [vmem:[%s177 + $0xc] sm:$0xf]
      %v194 = vld [vmem:[%s177 + $0x10] sm:$0xf]
      %v195 = vld [vmem:[%s177 + $0x14] sm:$0xf]
      %v196 = vld [vmem:[%s177 + $0x18] sm:$0xf]
      %v197 = vld [vmem:[%s177 + $0x1c] sm:$0xf]
      %v198 = vld [vmem:[%s177 + $0x20] sm:$0xf]
      %v199 = vld [vmem:[%s177 + $0x24] sm:$0xf]
      %v200 = vld [vmem:[%s177 + $0x28] sm:$0xf]
      %v201 = vld [vmem:[%s177 + $0x2c] sm:$0xf]
      %v202 = vld [vmem:[%s177 + $0x30] sm:$0xf]
      %v203 = vld [vmem:[%s177 + $0x34] sm:$0xf]
      %v204 = vld [vmem:[%s177 + $0x38] sm:$0xf]
      %v205 = vld [vmem:[%s177 + $0x3c] sm:$0xf]
      %v206 = vunpack.c.l.bf16 %v190
      %v207 = vunpack.c.l.bf16 %v191
      %v208 = vunpack.c.l.bf16 %v192
      %v209 = vunpack.c.l.bf16 %v193
      %v210 = vunpack.c.l.bf16 %v194
      %v211 = vunpack.c.l.bf16 %v195
      %v212 = vunpack.c.l.bf16 %v196
      %v213 = vunpack.c.l.bf16 %v197
      %v214 = vunpack.c.l.bf16 %v198
      %v215 = vunpack.c.l.bf16 %v199
      %v216 = vunpack.c.l.bf16 %v200
      %v217 = vunpack.c.l.bf16 %v201
      %v218 = vunpack.c.l.bf16 %v202
      %v219 = vunpack.c.l.bf16 %v203
      %v220 = vunpack.c.l.bf16 %v204
      %v221 = vunpack.c.l.bf16 %v205
      %v222 = vadd.f32 %v206, %v207
      %v223 = vrot.slane %v222, 4
      %v224 = vadd.f32 %v222, %v223
      %v225 = vrot.slane %v224, 2
      %v226 = vadd.f32 %v224, %v225
      %v227 = vrot.slane %v226, 1
      %v228 = vadd.f32 %v226, %v227
      %v229 = vadd.f32 %v208, %v209
      %v230 = vrot.slane %v229, 4
      %v231 = vadd.f32 %v229, %v230
      %v232 = vrot.slane %v231, 2
      %v233 = vadd.f32 %v231, %v232
      %v234 = vrot.slane %v233, 1
      %v235 = vadd.f32 %v233, %v234
      %v236 = vadd.f32 %v210, %v211
      %v237 = vrot.slane %v236, 4
      %v238 = vadd.f32 %v236, %v237
      %v239 = vrot.slane %v238, 2
      %v240 = vadd.f32 %v238, %v239
      %v241 = vrot.slane %v240, 1
      %v242 = vadd.f32 %v240, %v241
      %v243 = vadd.f32 %v212, %v213
      %v244 = vrot.slane %v243, 4
      %v245 = vadd.f32 %v243, %v244
      %v246 = vrot.slane %v245, 2
      %v247 = vadd.f32 %v245, %v246
      %v248 = vrot.slane %v247, 1
      %v249 = vadd.f32 %v247, %v248
      %v250 = vadd.f32 %v214, %v215
      %v251 = vrot.slane %v250, 4
      %v252 = vadd.f32 %v250, %v251
      %v253 = vrot.slane %v252, 2
      %v254 = vadd.f32 %v252, %v253
      %v255 = vrot.slane %v254, 1
      %v256 = vadd.f32 %v254, %v255
      %v257 = vadd.f32 %v216, %v217
      %v258 = vrot.slane %v257, 4
      %v259 = vadd.f32 %v257, %v258
      %v260 = vrot.slane %v259, 2
      %v261 = vadd.f32 %v259, %v260
      %v262 = vrot.slane %v261, 1
      %v263 = vadd.f32 %v261, %v262
      %v264 = vadd.f32 %v218, %v219
      %v265 = vrot.slane %v264, 4
      %v266 = vadd.f32 %v264, %v265
      %v267 = vrot.slane %v266, 2
      %v268 = vadd.f32 %v266, %v267
      %v269 = vrot.slane %v268, 1
      %v270 = vadd.f32 %v268, %v269
      %v271 = vadd.f32 %v220, %v221
      %v272 = vrot.slane %v271, 4
      %v273 = vadd.f32 %v271, %v272
      %v274 = vrot.slane %v273, 2
      %v275 = vadd.f32 %v273, %v274
      %v276 = vrot.slane %v275, 1
      %v277 = vadd.f32 %v275, %v276
      %v278 = vrcp.pop 16.0
      %v279 = vmul.f32 %v228, %v278
      %v280 = vmul.f32 %v235, %v278
      %v281 = vmul.f32 %v242, %v278
      %v282 = vmul.f32 %v249, %v278
      %v283 = vmul.f32 %v256, %v278
      %v284 = vmul.f32 %v263, %v278
      %v285 = vmul.f32 %v270, %v278
      %v286 = vmul.f32 %v277, %v278
      %v287 = vpack.c.bf16 %v279, %v279
      %v288 = vpack.c.bf16 %v280, %v280
      %v289 = vpack.c.bf16 %v281, %v281
      %v290 = vpack.c.bf16 %v282, %v282
      %v291 = vpack.c.bf16 %v283, %v283
      %v292 = vpack.c.bf16 %v284, %v284
      %v293 = vpack.c.bf16 %v285, %v285
      %v294 = vpack.c.bf16 %v286, %v286
      %v295 = vld [vmem:[%s1] sm:$0xff]
      %v296 = vld [vmem:[%s1 + $0x8] sm:$0xff]
      %v297 = vld [vmem:[%s1 + $0x10] sm:$0xff]
      %v298 = vld [vmem:[%s1 + $0x18] sm:$0xff]
      %v299 = vld [vmem:[%s1 + $0x20] sm:$0xff]
      %v300 = vld [vmem:[%s1 + $0x28] sm:$0xff]
      %v301 = vld [vmem:[%s1 + $0x30] sm:$0xff]
      %v302 = vld [vmem:[%s1 + $0x38] sm:$0xff]
      %v303 = vld [vmem:[%s1 + $0x40] sm:$0xff]
      %v304 = vld [vmem:[%s1 + $0x48] sm:$0xff]
      %v305 = vld [vmem:[%s1 + $0x50] sm:$0xff]
      %v306 = vld [vmem:[%s1 + $0x58] sm:$0xff]
      %v307 = vld [vmem:[%s1 + $0x60] sm:$0xff]
      %v308 = vld [vmem:[%s1 + $0x68] sm:$0xff]
      %v309 = vld [vmem:[%s1 + $0x70] sm:$0xff]
      %v310 = vld [vmem:[%s1 + $0x78] sm:$0xff]
      %v319 = vunpack.c.l.b16 %v287
      %v320 = vunpack.c.l.b16 %v288
      %v321 = vunpack.c.l.b16 %v289
      %v322 = vunpack.c.l.b16 %v290
      %v323 = vunpack.c.l.b16 %v291
      %v324 = vunpack.c.l.b16 %v292
      %v325 = vunpack.c.l.b16 %v293
      %v326 = vunpack.c.l.b16 %v294
      %vm327 = vcmask 1041409
      %v328 = vsel %vm327, %v320, %v319
      %vm329 = vcmask 1042434
      %v330 = vsel %vm329, %v321, %v328
      %vm331 = vcmask 1043459
      %v332 = vsel %vm331, %v322, %v330
      %vm333 = vcmask 1044484
      %v334 = vsel %vm333, %v323, %v332
      %vm335 = vcmask 1045509
      %v336 = vsel %vm335, %v324, %v334
      %vm337 = vcmask 1046534
      %v338 = vsel %vm337, %v325, %v336
      %vm339 = vcmask 1047559
      %v340 = vsel %vm339, %v326, %v338
      %v341 = vpack.c.b16 %v340, %v340
      %v359 = vunpack.c.l.b16 %v295
      %v360 = vunpack.c.h.b16 %v295
      %v361 = vunpack.c.l.b16 %v296
      %v362 = vunpack.c.h.b16 %v296
      %v363 = vunpack.c.l.b16 %v297
      %v364 = vunpack.c.h.b16 %v297
      %v365 = vunpack.c.l.b16 %v298
      %v366 = vunpack.c.h.b16 %v298
      %v367 = vunpack.c.l.b16 %v299
      %v368 = vunpack.c.h.b16 %v299
      %v369 = vunpack.c.l.b16 %v300
      %v370 = vunpack.c.h.b16 %v300
      %v371 = vunpack.c.l.b16 %v301
      %v372 = vunpack.c.h.b16 %v301
      %v373 = vunpack.c.l.b16 %v302
      %v374 = vunpack.c.h.b16 %v302
      %v375 = vunpack.c.l.b16 %v303
      %v376 = vunpack.c.h.b16 %v303
      %v377 = vunpack.c.l.b16 %v304
      %v378 = vunpack.c.h.b16 %v304
      %v379 = vunpack.c.l.b16 %v305
      %v380 = vunpack.c.h.b16 %v305
      %v381 = vunpack.c.l.b16 %v306
      %v382 = vunpack.c.h.b16 %v306
      %v383 = vunpack.c.l.b16 %v307
      %v384 = vunpack.c.h.b16 %v307
      %v385 = vunpack.c.l.b16 %v308
      %v386 = vunpack.c.h.b16 %v308
      %v387 = vunpack.c.l.b16 %v309
      %v388 = vunpack.c.h.b16 %v309
      %v389 = vunpack.c.l.b16 %v310
      %v390 = vunpack.c.h.b16 %v310
      %v391 = vpack.c.b16 %v361, %v359
      %v392 = vpack.c.b16 %v362, %v360
      %v393 = vpack.c.b16 %v365, %v363
      %v394 = vpack.c.b16 %v366, %v364
      %v395 = vpack.c.b16 %v369, %v367
      %v396 = vpack.c.b16 %v370, %v368
      %v397 = vpack.c.b16 %v373, %v371
      %v398 = vpack.c.b16 %v374, %v372
      %v399 = vpack.c.b16 %v377, %v375
      %v400 = vpack.c.b16 %v378, %v376
      %v401 = vpack.c.b16 %v381, %v379
      %v402 = vpack.c.b16 %v382, %v380
      %v403 = vpack.c.b16 %v385, %v383
      %v404 = vpack.c.b16 %v386, %v384
      %v405 = vpack.c.b16 %v389, %v387
      %v406 = vpack.c.b16 %v390, %v388
      %423 = vmatprep.subr.bf16.mxu0 %v392
      %424 = vmatpush1.bf16.msra.mxu0 %v391
      %425 = vmatprep.subr.bf16.mxu0 %v394
      %426 = vmatpush1.bf16.msra.mxu0 %v393
      %427 = vmatprep.subr.bf16.mxu0 %v396
      %428 = vmatpush1.bf16.msra.mxu0 %v395
      %429 = vmatprep.subr.bf16.mxu0 %v398
      %430 = vmatpush1.bf16.msra.mxu0 %v397
      %431 = vmatprep.subr.bf16.mxu0 %v400
      %432 = vmatpush1.bf16.msra.mxu0 %v399
      %433 = vmatprep.subr.bf16.mxu0 %v402
      %434 = vmatpush1.bf16.msra.mxu0 %v401
      %435 = vmatprep.subr.bf16.mxu0 %v404
      %436 = vmatpush1.bf16.msra.mxu0 %v403
      %437 = vmatprep.subr.bf16.mxu0 %v406
      %438 = vmatpush1.bf16.msra.mxu0 %v405
      %439 = vmatprep.subr.bf16.mxu0 0
      %440 = vmatpush1.bf16.msra.mxu0 0
      %441 = vmatprep.subr.bf16.mxu0 0
      %442 = vmatpush1.bf16.msra.mxu0 0
      %443 = vmatprep.subr.bf16.mxu0 0
      %444 = vmatpush1.bf16.msra.mxu0 0
      %445 = vmatprep.subr.bf16.mxu0 0
      %446 = vmatpush1.bf16.msra.mxu0 0
      %447 = vmatprep.subr.bf16.mxu0 0
      %448 = vmatpush1.bf16.msra.mxu0 0
      %449 = vmatprep.subr.bf16.mxu0 0
      %450 = vmatpush1.bf16.msra.mxu0 0
      %451 = vmatprep.subr.bf16.mxu0 0
      %452 = vmatpush1.bf16.msra.mxu0 0
      %453 = vmatprep.subr.bf16.mxu0 0
      %454 = vmatpush1.bf16.msra.mxu0 0
      %455 = vmatprep.mubr.bf16.mxu0 0
      %456 = vmatmul.mubr.bf16.gmra.mrb[0].mxu0 %v341
      %v457 = vpop.f32.mrb[0].mxu0
      %v458 = vadd.f32 0.0, %v457
      %v459 = vpop.f32.mrb[0].mxu0
      %v460 = vadd.f32 0.0, %v459
      %v461 = vpop.f32.mrb[0].mxu0
      %v462 = vpop.f32.mrb[0].mxu0
      %463 = vdwg.mxu0
      %464 = vst [vmem:[%s183] sm:$0xff] %v458
      %465 = vst [vmem:[%s183 + $0x8] sm:$0xff] %v460
      %s466 = smul.u32 %s15, 8
      %v467 = vlaneseq
      %v468 = vshrl.u32 %v467, 7
      %v469 = vstv %s466
      %v470 = vadd.s32 %v469, %v468
      %vm471 = vcmp.lt.s32.totalorder %v470, 20
      %v472 = vsel %vm471, 1, 0
      %v473 = vcvt.s32.f32 %v472
      %v474 = vmul.f32 %v458, %v473
      %v475 = vmul.f32 %v460, %v473
      %v476 = vrot.slane %v474, 4
      %v477 = vadd.f32 %v474, %v476
      %v478 = vrot.slane %v477, 2
      %v479 = vadd.f32 %v477, %v478
      %v480 = vrot.slane %v479, 1
      %v481 = vadd.f32 %v479, %v480
      %v482 = vrot.slane %v475, 4
      %v483 = vadd.f32 %v475, %v482
      %v484 = vrot.slane %v483, 2
      %v485 = vadd.f32 %v483, %v484
      %v486 = vrot.slane %v485, 1
      %v487 = vadd.f32 %v485, %v486
      %v488 = vmul.f32 %v474, %v458
      %v489 = vmul.f32 %v475, %v460
      %v490 = vrot.slane %v488, 4
      %v491 = vadd.f32 %v488, %v490
      %v492 = vrot.slane %v491, 2
      %v493 = vadd.f32 %v491, %v492
      %v494 = vrot.slane %v493, 1
      %v495 = vadd.f32 %v493, %v494
      %v496 = vrot.slane %v489, 4
      %v497 = vadd.f32 %v489, %v496
      %v498 = vrot.slane %v497, 2
      %v499 = vadd.f32 %v497, %v498
      %v500 = vrot.slane %v499, 1
      %v501 = vadd.f32 %v499, %v500
      %vm502 = vcmask 1040384
      %v503 = vsel %vm502, %v481, %v495
      %v504 = vsel %vm502, %v487, %v501
      %v507 = vcombine.low %v503, %v504
      %v509 = vunpack.c.l.s4 1983009808
      %v510 = vunpack.c.0.s8 %v509
      %v511 = vlaneseq
      %v512 = vshrl.u32 %v511, 7
      %v513 = vsub.s32 %v510, %v512
      %v514 = vrot.slane %v507, %v513
      %516 = vst [vmem:[%s188] sm:$0xf] %v514
      %p517 = scmp.lt.s32.totalorder %s15, 2
      %s518 = scalar_select %p517, %s15, 2
      %s519 = smul.addr %s518, 2
      %s520 = smul.addr %s519, 8
      %s521 = scalar_lea.vmem %s2, %s520
      %p522 = scmp.lt.s32.totalorder %s15, 2
      %s523 = scalar_select %p522, %s15, 2
      %s524 = smul.addr %s523, 2
      %s525 = smul.addr %s524, 2
      %s526 = scalar_lea.vmem %s3, %s525
      // Predicated region
      $region29: #{nonlinear_neck_v2.2} parent=27 // pred_check
        %p527 = pneg %p80
      $region30: #{nonlinear_neck_v2.2} parent=27 // pred_check_branch
        %529 = sbr.rel (%p527) target = $region32
      $region31: #{nonlinear_neck_v2.2} parent=27 // pred_region
        _
      $region32: #{nonlinear_neck_v2.2} parent=27 // pred_fallthru
        _
      // Predicated region
      $region33: #{nonlinear_neck_v2.2} parent=27 // pred_check
        %p530 = pneg %p106
      $region34: #{nonlinear_neck_v2.2} parent=27 // pred_check_branch
        %532 = sbr.rel (%p530) target = $region36
      $region35: #{nonlinear_neck_v2.2} parent=27 // pred_region
        _
      $region36: #{nonlinear_neck_v2.2} parent=27 // pred_fallthru
        _
    $region28: #{nonlinear_neck_v2.2} parent=5 // pred_fallthru
      _
    %p533 = scmp.le.s32.totalorder 2, %s10
    // Predicated region
    $region37: #{nonlinear_neck_v2.2} parent=5 // pred_check
      %p534 = pneg %p533
    $region38: #{nonlinear_neck_v2.2} parent=5 // pred_check_branch
      %536 = sbr.rel (%p534) target = $region40
    $region39: #{nonlinear_neck_v2.2} parent=5 // pred_region
      %s537 = ssub.s32 %s10, 2
      // Predicated region
      $region41: #{nonlinear_neck_v2.2} parent=39 // pred_check
        %p538 = pneg %p86
      $region42: #{nonlinear_neck_v2.2} parent=39 // pred_check_branch
        %540 = sbr.rel (%p538) target = $region44
      $region43: #{nonlinear_neck_v2.2} parent=39 // pred_region
        %p541 = scmp.lt.s32.totalorder %s16, 2
        %s542 = scalar_select %p541, %s16, 2
        %s543 = smul.addr %s542, 2
        %s544 = smul.addr %s543, 8
        %s545 = scalar_lea.vmem %s2, %s544
      $region44: #{nonlinear_neck_v2.2} parent=39 // pred_fallthru
        _
      // Predicated region
      $region45: #{nonlinear_neck_v2.2} parent=39 // pred_check
        %p546 = pneg %p112
      $region46: #{nonlinear_neck_v2.2} parent=39 // pred_check_branch
        %548 = sbr.rel (%p546) target = $region48
      $region47: #{nonlinear_neck_v2.2} parent=39 // pred_region
        %p549 = scmp.lt.s32.totalorder %s16, 2
        %s550 = scalar_select %p549, %s16, 2
        %s551 = smul.addr %s550, 2
        %s552 = smul.addr %s551, 2
        %s553 = scalar_lea.vmem %s3, %s552
      $region48: #{nonlinear_neck_v2.2} parent=39 // pred_fallthru
        _
    $region40: #{nonlinear_neck_v2.2} parent=5 // pred_fallthru
      _
  $region6: #{nonlinear_neck_v2.2} parent=0 // loop_footer
    %s14 = sadd.s32 1, %s10
  $region7: #{nonlinear_neck_v2.2} parent=0 // loop_footer_branch
    %9 = sbr.rel target = $region3
  $region8: #{nonlinear_neck_v2.2} parent=0 // loop_exit
    _

</llo_original>
